<compile_context>
chip_gen: v5e
topology: v5e:2x2
jax: 0.10.0
libtpu: 0.0.40
codegen_flags: <defaults>
</compile_context>

<pallas_src>
import jax
import jax.numpy as jnp
from jax import lax
from jax.experimental import pallas as pl
from jax.experimental.pallas import tpu as pltpu


def _genres_ae_kernel(x_ref, m_ref, c_ref, o_ref):
    """out = leaky_relu(x_tile @ M + c) — one MXU matmul + VPU select."""
    x = x_ref[...]                       # (TILE_B, G)
    m = m_ref[...]                       # (G, G)   resident, folded W^T @ W
    c = c_ref[...]                       # (1, G)   folded bias b @ W
    out = jnp.dot(x, m, preferred_element_type=jnp.float32) + c
    out = jnp.where(out > 0, out, 0.01 * out)   # LeakyReLU, slope 0.01
    o_ref[...] = out.astype(o_ref.dtype)


def genres_ae_forward(x, weight, bias, *, tile_b=512):
    """x: (B, G), weight: (H, G) == nn.Linear(G, H).weight, bias: (H,) -> (B, G)."""
    B, G = x.shape
    H, G2 = weight.shape
    assert G == G2 and bias.shape == (H,)

    # One-time weight folding (static w.r.t. the batch). Contract on H (dim 0 of
    # both operands) so no explicit transpose of W is ever materialized.
    m = lax.dot_general(weight, weight,
                        dimension_numbers=(((0,), (0,)), ((), ())),
                        preferred_element_type=jnp.float32)            # (G, G)
    c = lax.dot_general(bias.reshape(1, H), weight,
                        dimension_numbers=(((1,), (0,)), ((), ())),
                        preferred_element_type=jnp.float32)            # (1, G)
    m = m.astype(x.dtype)
    c = c.astype(x.dtype)

    # Batch grid: full block at small B; pipelined (TILE_B, G) tiles at large B.
    tb = min(tile_b, B)
    grid = (pl.cdiv(B, tb),)

    # TODO(synk): for very large B with G=16 the output stores are lane-masked
    # (16/128 lanes); a wrapper-side lane-dense repack of the output would help
    # at scale but is a pure loss at these shapes, so it is not done here.
    return pl.pallas_call(
        _genres_ae_kernel,
        out_shape=jax.ShapeDtypeStruct((B, G), x.dtype),
        grid_spec=pltpu.PrefetchScalarGridSpec(
            num_scalar_prefetch=0,
            grid=grid,
            in_specs=[
                pl.BlockSpec((tb, G), lambda i: (i, 0)),   # x tile (pipelined)
                pl.BlockSpec((G, G), lambda i: (0, 0)),    # M resident
                pl.BlockSpec((1, G), lambda i: (0, 0)),    # c resident
            ],
            out_specs=pl.BlockSpec((tb, G), lambda i: (i, 0)),
        ),
        compiler_params=pltpu.CompilerParams(
            dimension_semantics=("parallel",),             # v7x: shard batch over 2 TCs
        ),
    )(x, m, c)


def _reference(x, weight, bias):
    """Unfused reference matching the PyTorch forward exactly."""
    hidden = x @ weight.T + bias
    out = hidden @ weight
    return jnp.where(out > 0, out, 0.01 * out)


if __name__ == "__main__":
    # Small shapes consistent with the module: batch=4, genre_size=16, hid_dim=32
    B, GENRE_SIZE, HID_DIM = 4, 16, 32

    key = jax.random.PRNGKey(0)
    kx, kw, kb = jax.random.split(key, 3)

    x = jax.random.normal(kx, (B, GENRE_SIZE), dtype=jnp.float32)
    weight = jax.random.normal(kw, (HID_DIM, GENRE_SIZE), dtype=jnp.float32) * 0.1
    bias = jax.random.normal(kb, (HID_DIM,), dtype=jnp.float32) * 0.1

    out = jax.block_until_ready(genres_ae_forward(x, weight, bias))
    ref = _reference(x, weight, bias)

    assert out.shape == (B, GENRE_SIZE), out.shape
    # Folding W^T@W reassociates the f32 reduction, so allow a small tolerance.
    assert jnp.allclose(out, ref, atol=1e-4, rtol=1e-4), "mismatch vs reference"

    print("KERNEL_OK")
</pallas_src>

<mosaic_0001>
module attributes {stable_mosaic.version = 11 : i64} {
  func.func @_genres_ae_kernel(%arg0: i32, %arg1: memref<4x16xf32, #tpu.memory_space<vmem>>, %arg2: memref<16x16xf32, #tpu.memory_space<vmem>>, %arg3: memref<1x16xf32, #tpu.memory_space<vmem>>, %arg4: memref<4x16xf32, #tpu.memory_space<vmem>>) attributes {dimension_semantics = [#tpu.dimension_semantics<parallel>], iteration_bounds = array<i64: 1>, scalar_prefetch = 0 : i64, scratch_operands = 0 : i64, tpu.core_type = #tpu.core_type<tc>, window_params = [{transform_indices = @transform_0, window_bounds = array<i64: 4, 16>}, {pipeline_mode = #tpu.pipeline_mode<synchronous>, transform_indices = @transform_1, window_bounds = array<i64: 16, 16>}, {pipeline_mode = #tpu.pipeline_mode<synchronous>, transform_indices = @transform_2, window_bounds = array<i64: 1, 16>}, {transform_indices = @transform_3, window_bounds = array<i64: 4, 16>}]} {
    %c0 = arith.constant 0 : index
    %c0_0 = arith.constant 0 : index
    %0 = vector.load %arg1[%c0, %c0_0] : memref<4x16xf32, #tpu.memory_space<vmem>>, vector<4x16xf32>
    %c0_1 = arith.constant 0 : index
    %c0_2 = arith.constant 0 : index
    %1 = vector.load %arg2[%c0_1, %c0_2] : memref<16x16xf32, #tpu.memory_space<vmem>>, vector<16x16xf32>
    %c0_3 = arith.constant 0 : index
    %c0_4 = arith.constant 0 : index
    %2 = vector.load %arg3[%c0_3, %c0_4] : memref<1x16xf32, #tpu.memory_space<vmem>>, vector<1x16xf32>
    %cst = arith.constant dense<0.000000e+00> : vector<4x16xf32>
    %3 = tpu.matmul %0, %1, %cst {dimension_numbers = #tpu.dot_dimension_numbers<[1], [0], [0], [1], [0, 0, 1, 1], [], []>} : vector<4x16xf32>, vector<16x16xf32>, vector<4x16xf32> -> vector<4x16xf32>
    %4 = vector.broadcast %2 : vector<1x16xf32> to vector<4x16xf32>
    %5 = arith.addf %3, %4 : vector<4x16xf32>
    %cst_5 = arith.constant 0.000000e+00 : f32
    %6 = vector.broadcast %cst_5 : f32 to vector<4x16xf32>
    %7 = arith.cmpf ogt, %5, %6 : vector<4x16xf32>
    %cst_6 = arith.constant 0.00999999977 : f32
    %8 = vector.broadcast %cst_6 : f32 to vector<4x16xf32>
    %9 = arith.mulf %8, %5 : vector<4x16xf32>
    %10 = arith.select %7, %5, %9 : vector<4x16xi1>, vector<4x16xf32>
    %c0_7 = arith.constant 0 : index
    %c0_8 = arith.constant 0 : index
    %11 = vector.load %arg4[%c0_7, %c0_8] : memref<4x16xf32, #tpu.memory_space<vmem>>, vector<4x16xf32>
    tpu.vector_store %arg4[%c0_7, %c0_8], %10 {strides = array<i32>} : memref<4x16xf32, #tpu.memory_space<vmem>>, vector<4x16xf32>,
    return
  }
  func.func @transform_0(%arg0: i32) -> (i32, i32) {
    %c0_i32 = arith.constant 0 : i32
    %c0_i32_0 = arith.constant 0 : i32
    return %arg0, %c0_i32 : i32, i32
  }
  func.func @transform_1(%arg0: i32) -> (i32, i32) {
    %c0_i32 = arith.constant 0 : i32
    %c0_i32_0 = arith.constant 0 : i32
    %c0_i32_1 = arith.constant 0 : i32
    return %c0_i32, %c0_i32_0 : i32, i32
  }
  func.func @transform_2(%arg0: i32) -> (i32, i32) {
    %c0_i32 = arith.constant 0 : i32
    %c0_i32_0 = arith.constant 0 : i32
    %c0_i32_1 = arith.constant 0 : i32
    return %c0_i32, %c0_i32_0 : i32, i32
  }
  func.func @transform_3(%arg0: i32) -> (i32, i32) {
    %c0_i32 = arith.constant 0 : i32
    %c0_i32_0 = arith.constant 0 : i32
    return %arg0, %c0_i32 : i32, i32
  }
}

</mosaic_0001>

<llo_original>
// kernel: tpu_custom_call.1
$region0: #{tpu_custom_call.1}
  #allocation0 [shape = 'u32[]', space=smem, size = 0x4, offset = 0x4, fixed_abs, tag = 'smem constant byte address 0x4 - core index']
  #allocation1 [shape = 'u32[72,128]{1,0:T(1,128)}', space=vmem, size = 0x9000, scoped, tag = 'internal scratch']
  %s0 = inlined_call_operand.hbm [shape: f32[4,16], index: 0, kind: input, shape index: {}]
  %s1 = inlined_call_operand.hbm [shape: f32[16,16], index: 1, kind: input, shape index: {}]
  %s2 = inlined_call_operand.vmem [shape: f32[1,16], index: 2, kind: input, shape index: {}]
  %s3 = inlined_call_operand.hbm [shape: f32[4,16], index: 3, kind: output, shape index: {}]
  %s4 = sld [smem:[#allocation0]]
  $region30: #{tpu_custom_call.1} parent=0
    _
  %s6 = ssub.s32 1, %s4
  %s7 = scalar_select 0, %s6, %s4
  $region1: #{tpu_custom_call.1} parent=0
    #allocation2 [shape = 'u8[2048]{0}', space=vmem, size = 0x800, scoped, tag = 'input window, operand 0, single buffered']
    #allocation3 [shape = 's32[1]{0}', space=sflag, size = 0x4, scoped, tag = 'scoped memory for tpu_custom_call.1']
    #allocation4 [shape = 's32[1]{0}', space=sflag, size = 0x4, scoped, tag = 'scoped memory for tpu_custom_call.1']
    #allocation5 [shape = 'u8[8192]{0}', space=vmem, size = 0x2000, scoped, tag = 'input window, operand 1, single buffered']
    #allocation6 [shape = 's32[1]{0}', space=sflag, size = 0x4, scoped, tag = 'scoped memory for tpu_custom_call.1']
    #allocation7 [shape = 'u8[2048]{0}', space=vmem, size = 0x800, scoped, tag = 'output window, operand 0, single buffered']
    %8 = vsyncpa [#allocation3], 0
    %9 = vsyncpa [#allocation6], 0
    %10 = vsyncpa [#allocation4], 0
    // Predicated region
    $region2: #{tpu_custom_call.1} parent=1 // pred_check
      _
    $region3: #{tpu_custom_call.1} parent=1 // pred_check_branch
      %12 = sbr.rel (0) target = $region5
    $region4: #{tpu_custom_call.1} parent=1 // pred_region
      %14 = vsyncadd [#allocation3], 0
      %s16 = sshll.u32 %s0, 4
      %s17 = int_to_ptr.hbm [resolvable:$true] %s16
      %s18 = sshll.u32 [#allocation2], 4
      %s19 = int_to_ptr.vmem [resolvable:$true] %s18
      %21 = dma.hbm_to_vmem [thread:$0]  %s17, 64, %s19, [#allocation3]
    $region5: #{tpu_custom_call.1} parent=1 // pred_fallthru
      _
    // Predicated region
    $region6: #{tpu_custom_call.1} parent=1 // pred_check
      _
    $region7: #{tpu_custom_call.1} parent=1 // pred_check_branch
      %23 = sbr.rel (0) target = $region9
    $region8: #{tpu_custom_call.1} parent=1 // pred_region
      %25 = vsyncadd [#allocation6], 0
      %s26 = sshll.u32 %s1, 4
      %s27 = int_to_ptr.hbm [resolvable:$true] %s26
      %s28 = sshll.u32 [#allocation5], 4
      %s29 = int_to_ptr.vmem [resolvable:$true] %s28
      %34 = dma.hbm_to_vmem [thread:$0]  %s27, 256, %s29, [#allocation6], 128, 128, 8
    $region9: #{tpu_custom_call.1} parent=1 // pred_fallthru
      _
    // Predicated region
    $region10: #{tpu_custom_call.1} parent=1 // pred_check
      _
    $region11: #{tpu_custom_call.1} parent=1 // pred_check_branch
      %36 = sbr.rel (0) target = $region13
    $region12: #{tpu_custom_call.1} parent=1 // pred_region
      _
    $region13: #{tpu_custom_call.1} parent=1 // pred_fallthru
      _
    // Predicated region
    $region14: #{tpu_custom_call.1} parent=1 // pred_check
      _
    $region15: #{tpu_custom_call.1} parent=1 // pred_check_branch
      %38 = sbr.rel (0) target = $region17
    $region16: #{tpu_custom_call.1} parent=1 // pred_region
      %40 = dma.done [#allocation3], 64
    $region17: #{tpu_custom_call.1} parent=1 // pred_fallthru
      _
    // Predicated region
    $region18: #{tpu_custom_call.1} parent=1 // pred_check
      _
    $region19: #{tpu_custom_call.1} parent=1 // pred_check_branch
      %42 = sbr.rel (0) target = $region21
    $region20: #{tpu_custom_call.1} parent=1 // pred_region
      %44 = dma.done [#allocation6], 256
    $region21: #{tpu_custom_call.1} parent=1 // pred_fallthru
      _
    %v45 = vld [vmem:[#allocation2] sm:$0xf]
    %v46 = vld [vmem:[#allocation5] sm:$0xff]
    %v47 = vld [vmem:[#allocation5 + $0x8] sm:$0xff]
    %v48 = vld [vmem:[%s2] sm:$0x1]
    %v50 = vperm.slane %v48, 0
    %vm52 = vcmask 130048
    %v54 = vsel %vm52, %v45, 0
    %56 = vmatpush.msra.mxu0 0.0
    %57 = vmatpush.msra.mxu0 0.0
    %58 = vmatpush.msra.mxu0 0.0
    %59 = vmatpush.msra.mxu0 0.0
    %60 = vmatpush.msra.mxu0 0.0
    %61 = vmatpush.msra.mxu0 0.0
    %62 = vmatpush.msra.mxu0 0.0
    %63 = vmatpush.msra.mxu0 0.0
    %64 = vmatpush.msra.mxu0 0.0
    %65 = vmatpush.msra.mxu0 0.0
    %66 = vmatpush.msra.mxu0 0.0
    %67 = vmatpush.msra.mxu0 0.0
    %68 = vmatpush.msra.mxu0 0.0
    %69 = vmatpush.msra.mxu0 0.0
    %70 = vmatpush.msra.mxu0 %v47
    %71 = vmatpush.msra.mxu0 %v46
    %72 = vmatmul.f32.gmra.mxu0 %v54
    %v73 = vpop.f32.mrf.mxu0
    %v74 = vadd.f32 %v50, %v73
    %75 = vdwg.mxu0
    %vm76 = vcmp.gt.f32.partialorder %v74, 0.0
    %v77 = vmul.f32 %v74, 0.01
    %v78 = vsel %vm76, %v74, %v77
    %vm79 = vcmask 125952
    %80 = vst.msk [vmem:[#allocation7] sm:$0xf] %vm79, %v78
    // Predicated region
    $region22: #{tpu_custom_call.1} parent=1 // pred_check
      _
    $region23: #{tpu_custom_call.1} parent=1 // pred_check_branch
      %82 = sbr.rel (0) target = $region25
    $region24: #{tpu_custom_call.1} parent=1 // pred_region
      %84 = vsyncadd [#allocation4], 0
      %s86 = sshll.u32 [#allocation7], 4
      %s87 = int_to_ptr.vmem [resolvable:$true] %s86
      %s88 = sshll.u32 %s3, 4
      %s89 = int_to_ptr.hbm [resolvable:$true] %s88
      %91 = dma.vmem_to_hbm [thread:$0]  %s87, 64, %s89, [#allocation4]
    $region25: #{tpu_custom_call.1} parent=1 // pred_fallthru
      _
    // Predicated region
    $region26: #{tpu_custom_call.1} parent=1 // pred_check
      _
    $region27: #{tpu_custom_call.1} parent=1 // pred_check_branch
      %93 = sbr.rel (0) target = $region29
    $region28: #{tpu_custom_call.1} parent=1 // pred_region
      %95 = dma.done [#allocation4], 64
    $region29: #{tpu_custom_call.1} parent=1 // pred_fallthru
      _
    %96 = vsyncpa [#allocation3], 1
    %97 = vsyncpa [#allocation6], 1
    %98 = vsyncpa [#allocation4], 1

</llo_original>
